<compile_context>
chip_gen: v5e
topology: v5e:2x2
jax: 0.10.0
libtpu: 0.0.40
codegen_flags: <defaults>
</compile_context>

<pallas_src>
import functools

import jax
import jax.numpy as jnp
from jax.experimental import pallas as pl
from jax.experimental.pallas import tpu as pltpu

LN10 = 2.302585092994046
_LANES = 128
_SUBLANES = 8


def _loss_kernel(ab_ref, p_ref, t_ref, e_ref, out_ref, *,
                 num_cols, block_rows, lanes, tail_rows):
    """One grid step: partial sum of (p'-t')^2 / e' over a (block_rows, lanes) tile.

    The tile is either a lane-dense view of the flattened [N, C] inputs
    (lanes == 128, num_cols divides 128) or the original [N, C] rows
    (lanes == num_cols).  Column 2 is found with a lane-periodic mask, so no
    global flat index is ever materialized.
    """
    a = ab_ref[0]   # cat_std[2]  * ln(10)
    b = ab_ref[1]   # cat_mean[2] * ln(10)

    p = p_ref[...].astype(jnp.float32)
    t = t_ref[...].astype(jnp.float32)
    e = e_ref[...].astype(jnp.float32)

    # Hoisted (1, lanes) column-2 mask; the selects below broadcast it over
    # sublanes (no per-element flat-index arithmetic).
    lane_i = jax.lax.broadcasted_iota(jnp.int32, (1, lanes), 1)
    is_col2 = (lane_i % num_cols) == 2

    # expz column de-standardization: 10**(x*std+mean) == exp(ln10*std*x + ln10*mean).
    # TODO(synk): on v7x, if a bundle dump shows EUP saturated, compute these two
    # exps only on a compacted col-2 lane slice (XLU gather is idle here).
    p_exp = jnp.exp(p * a + b)
    t_exp = jnp.exp(t * a + b)

    diff = jnp.where(is_col2, p_exp - t_exp, p - t)
    # NOTE: the reference's `target_errs_transformed[:, 2] *= cat_std[2]` is dead
    # code (immediately overwritten), so only the abs(...) form matters.
    err = jnp.where(is_col2, jnp.abs(e * LN10 * t_exp), e)

    # TODO(synk): on v7x consider pl.reciprocal(err, approx=True) + 1 NR step if
    # the divide's EUP/VALU path binds; exact divide kept for fidelity.
    vals = diff * diff / err

    def _reduce(v):
        # VALU-only in-tile reduction down to one (8, lanes) partial vreg-slab.
        if block_rows % _SUBLANES == 0:
            return v.reshape(block_rows // _SUBLANES, _SUBLANES, lanes).sum(axis=0)
        # Tiny single-block case (block_rows < 8): put the row-sum in sublane 0.
        row = jnp.sum(v, axis=0, keepdims=True)                       # (1, lanes)
        sub_i = jax.lax.broadcasted_iota(jnp.int32, (_SUBLANES, lanes), 0)
        return jnp.where(sub_i == 0, row, 0.0)

    if tail_rows == 0:
        # Grid divides evenly: every block is full, no masking anywhere.
        out_ref[...] = _reduce(vals)
    else:
        # Only the final (partial) block pays for the row-validity mask.
        is_last = pl.program_id(0) == pl.num_programs(0) - 1

        @pl.when(jnp.logical_not(is_last))
        def _():
            out_ref[...] = _reduce(vals)

        @pl.when(is_last)
        def _():
            row_i = jax.lax.broadcasted_iota(jnp.int32, (block_rows, lanes), 0)
            out_ref[...] = _reduce(jnp.where(row_i < tail_rows, vals, 0.0))


def custom_loss_expz(preds, targets, target_err, cat_mean, cat_std,
                     *, block_rows=4096):
    """Pallas implementation of CustomLossExpz.forward. Returns a scalar."""
    assert preds.shape == targets.shape == target_err.shape
    assert preds.ndim == 2
    n, c = preds.shape
    total = n * c

    # The only two scalars the loss needs (col-2 de-standardization), in SMEM.
    ab = jnp.stack([cat_std[2] * LN10, cat_mean[2] * LN10]).astype(jnp.float32)

    if total % _LANES == 0 and _LANES % c == 0:
        # Lane-dense view: pure metadata reshape of the row-major data
        # (no pad, no copy).  Column phase is lane-periodic since C | 128.
        rows, lanes = total // _LANES, _LANES
        args = (preds.reshape(rows, lanes),
                targets.reshape(rows, lanes),
                target_err.reshape(rows, lanes))
    else:
        # Zero-copy fallback: stream the original [N, C] rows untouched.
        rows, lanes = n, c
        args = (preds, targets, target_err)

    # Block size: multiple of 8 sublanes when possible; full array when tiny.
    block_rows = max(_SUBLANES, (block_rows // _SUBLANES) * _SUBLANES)
    if rows >= _SUBLANES:
        blk = min(block_rows, (rows // _SUBLANES) * _SUBLANES)
    else:
        blk = rows                                  # single full-array block
    num_blocks = pl.cdiv(rows, blk)
    tail_rows = rows - (num_blocks - 1) * blk
    tail_rows = 0 if tail_rows == blk else tail_rows   # 0 => no masking emitted

    kernel = functools.partial(_loss_kernel, num_cols=c, block_rows=blk,
                               lanes=lanes, tail_rows=tail_rows)

    partials = pl.pallas_call(
        kernel,
        out_shape=jax.ShapeDtypeStruct((num_blocks * _SUBLANES, lanes),
                                       jnp.float32),
        grid=(num_blocks,),
        in_specs=[
            pl.BlockSpec(memory_space=pltpu.SMEM),            # (a, b) scalars
            pl.BlockSpec((blk, lanes), lambda i: (i, 0)),     # preds
            pl.BlockSpec((blk, lanes), lambda i: (i, 0)),     # targets
            pl.BlockSpec((blk, lanes), lambda i: (i, 0)),     # target_err
        ],
        out_specs=pl.BlockSpec((_SUBLANES, lanes), lambda i: (i, 0)),
        compiler_params=pltpu.CompilerParams(
            dimension_semantics=("parallel",),
            # 3 inputs x 2 buffers x (4096, 128) f32 = 12 MiB of stream buffers
            # + elementwise temporaries; comfortably under every generation's
            # physical VMEM, above the 16/32 MiB scoped defaults.
            vmem_limit_bytes=64 * 1024 * 1024,
        ),
    )(ab, *args)

    # Tiny final cross-lane reduce + mean normalization outside the kernel.
    return jnp.sum(partials) / jnp.float32(total)


def _reference(preds, targets, target_err, cat_mean, cat_std):
    """Pure-JAX reference mirroring the PyTorch forward exactly."""
    preds_t = preds.at[:, 2].set(10.0 ** (preds[:, 2] * cat_std[2] + cat_mean[2]))
    targets_t = targets.at[:, 2].set(10.0 ** (targets[:, 2] * cat_std[2] + cat_mean[2]))
    errs_t = target_err.at[:, 2].set(
        jnp.abs(target_err[:, 2] * LN10 * targets_t[:, 2])
    )
    return jnp.mean((preds_t - targets_t) ** 2 / errs_t)


def _make_inputs(key, n, c):
    k1, k2, k3 = jax.random.split(key, 3)
    preds = jax.random.normal(k1, (n, c), dtype=jnp.float32)
    targets = jax.random.normal(k2, (n, c), dtype=jnp.float32)
    # Strictly-positive errors so the division is well behaved.
    target_err = jax.random.uniform(
        k3, (n, c), dtype=jnp.float32, minval=0.1, maxval=1.0
    )
    return preds, targets, target_err


if __name__ == "__main__":
    key = jax.random.PRNGKey(0)
    C = 8  # 8 catalog columns (column 2 = expz)

    # Deterministic stand-ins for the script-level globals cat_mean / cat_std.
    cat_mean = jnp.linspace(0.1, 0.8, C, dtype=jnp.float32)
    cat_std = jnp.linspace(0.5, 1.2, C, dtype=jnp.float32)

    checks = [
        # (N, block_rows) — covers lane-dense single block, zero-copy ragged
        # fallback with a masked tail block, and lane-dense multi-block + tail.
        (16, 4096),
        (13, 4096),
        (160, 64),
    ]
    for n, brows in checks:
        preds, targets, target_err = _make_inputs(jax.random.fold_in(key, n), n, C)
        loss = custom_loss_expz(preds, targets, target_err, cat_mean, cat_std,
                                block_rows=brows)
        loss = jax.block_until_ready(loss)
        ref = _reference(preds, targets, target_err, cat_mean, cat_std)
        assert jnp.allclose(loss, ref, rtol=1e-5, atol=1e-5), (n, loss, ref)

    print("KERNEL_OK")
</pallas_src>

<mosaic_0001>
module attributes {stable_mosaic.version = 11 : i64} {
  func.func @_loss_kernel(%arg0: i32, %arg1: memref<2xf32, #tpu.memory_space<smem>>, %arg2: memref<1x128xf32, #tpu.memory_space<vmem>>, %arg3: memref<1x128xf32, #tpu.memory_space<vmem>>, %arg4: memref<1x128xf32, #tpu.memory_space<vmem>>, %arg5: memref<8x128xf32, #tpu.memory_space<vmem>>) attributes {dimension_semantics = [#tpu.dimension_semantics<parallel>], iteration_bounds = array<i64: 1>, scalar_prefetch = 0 : i64, scratch_operands = 0 : i64, tpu.core_type = #tpu.core_type<tc>, window_params = [{transform_indices = @transform_0, window_bounds = array<i64: 2>}, {transform_indices = @transform_1, window_bounds = array<i64: 1, 128>}, {transform_indices = @transform_2, window_bounds = array<i64: 1, 128>}, {transform_indices = @transform_3, window_bounds = array<i64: 1, 128>}, {transform_indices = @transform_4, window_bounds = array<i64: 8, 128>}]} {
    %c0 = arith.constant 0 : index
    %0 = memref.load %arg1[%c0] : memref<2xf32, #tpu.memory_space<smem>>
    %c1 = arith.constant 1 : index
    %1 = memref.load %arg1[%c1] : memref<2xf32, #tpu.memory_space<smem>>
    %c0_0 = arith.constant 0 : index
    %c0_1 = arith.constant 0 : index
    %2 = vector.load %arg2[%c0_0, %c0_1] : memref<1x128xf32, #tpu.memory_space<vmem>>, vector<1x128xf32>
    %c0_2 = arith.constant 0 : index
    %c0_3 = arith.constant 0 : index
    %3 = vector.load %arg3[%c0_2, %c0_3] : memref<1x128xf32, #tpu.memory_space<vmem>>, vector<1x128xf32>
    %c0_4 = arith.constant 0 : index
    %c0_5 = arith.constant 0 : index
    %4 = vector.load %arg4[%c0_4, %c0_5] : memref<1x128xf32, #tpu.memory_space<vmem>>, vector<1x128xf32>
    %5 = tpu.iota {dimensions = array<i32: 1>} : vector<1x128xi32>
    %c8_i32 = arith.constant 8 : i32
    %c0_i32 = arith.constant 0 : i32
    %6 = arith.cmpi eq, %c8_i32, %c0_i32 : i32
    %c1_i32 = arith.constant 1 : i32
    %7 = arith.select %6, %c1_i32, %c8_i32 : i32
    %8 = vector.broadcast %7 : i32 to vector<1x128xi32>
    %9 = arith.remsi %5, %8 : vector<1x128xi32>
    %c0_i32_6 = arith.constant 0 : i32
    %10 = vector.broadcast %c0_i32_6 : i32 to vector<1x128xi32>
    %11 = arith.cmpi ne, %9, %10 : vector<1x128xi32>
    %c0_i32_7 = arith.constant 0 : i32
    %12 = vector.broadcast %c0_i32_7 : i32 to vector<1x128xi32>
    %13 = arith.cmpi slt, %9, %12 : vector<1x128xi32>
    %c0_i32_8 = arith.constant 0 : i32
    %14 = arith.cmpi slt, %7, %c0_i32_8 : i32
    %15 = vector.broadcast %14 : i1 to vector<1x128xi1>
    %16 = vector.broadcast %15 : vector<1x128xi1> to vector<1x128xi1>
    %17 = arith.xori %13, %16 : vector<1x128xi1>
    %18 = arith.andi %17, %11 : vector<1x128xi1>
    %19 = vector.broadcast %7 : i32 to vector<1x128xi32>
    %20 = arith.addi %9, %19 : vector<1x128xi32>
    %21 = arith.select %18, %20, %9 : vector<1x128xi1>, vector<1x128xi32>
    %c2_i32 = arith.constant 2 : i32
    %22 = vector.broadcast %c2_i32 : i32 to vector<1x128xi32>
    %23 = arith.cmpi eq, %21, %22 : vector<1x128xi32>
    %24 = vector.broadcast %0 : f32 to vector<1x128xf32>
    %25 = arith.mulf %2, %24 : vector<1x128xf32>
    %26 = vector.broadcast %1 : f32 to vector<1x128xf32>
    %27 = arith.addf %25, %26 : vector<1x128xf32>
    %28 = math.exp %27 : vector<1x128xf32>
    %29 = vector.broadcast %0 : f32 to vector<1x128xf32>
    %30 = arith.mulf %3, %29 : vector<1x128xf32>
    %31 = vector.broadcast %1 : f32 to vector<1x128xf32>
    %32 = arith.addf %30, %31 : vector<1x128xf32>
    %33 = math.exp %32 : vector<1x128xf32>
    %34 = arith.subf %28, %33 : vector<1x128xf32>
    %35 = arith.subf %2, %3 : vector<1x128xf32>
    %36 = arith.select %23, %34, %35 : vector<1x128xi1>, vector<1x128xf32>
    %cst = arith.constant 2.30258512 : f32
    %37 = vector.broadcast %cst : f32 to vector<1x128xf32>
    %38 = arith.mulf %4, %37 : vector<1x128xf32>
    %39 = arith.mulf %38, %33 : vector<1x128xf32>
    %40 = math.absf %39 : vector<1x128xf32>
    %41 = arith.select %23, %40, %4 : vector<1x128xi1>, vector<1x128xf32>
    %42 = arith.mulf %36, %36 : vector<1x128xf32>
    %43 = arith.divf %42, %41 : vector<1x128xf32>
    %cst_9 = arith.constant dense<0.000000e+00> : vector<128xf32>
    %44 = vector.multi_reduction <add>, %43, %cst_9 [0] : vector<1x128xf32> to vector<128xf32>
    %45 = vector.shape_cast %44 : vector<128xf32> to vector<1x128xf32>
    %46 = tpu.iota {dimensions = array<i32: 0>} : vector<8x128xi32>
    %c0_i32_10 = arith.constant 0 : i32
    %47 = vector.broadcast %c0_i32_10 : i32 to vector<8x128xi32>
    %48 = arith.cmpi eq, %46, %47 : vector<8x128xi32>
    %cst_11 = arith.constant 0.000000e+00 : f32
    %49 = vector.shape_cast %45 : vector<1x128xf32> to vector<1x128xf32>
    %50 = vector.broadcast %49 : vector<1x128xf32> to vector<8x128xf32>
    %51 = vector.broadcast %cst_11 : f32 to vector<8x128xf32>
    %52 = arith.select %48, %50, %51 : vector<8x128xi1>, vector<8x128xf32>
    %c0_12 = arith.constant 0 : index
    %c0_13 = arith.constant 0 : index
    %53 = vector.load %arg5[%c0_12, %c0_13] : memref<8x128xf32, #tpu.memory_space<vmem>>, vector<8x128xf32>
    tpu.vector_store %arg5[%c0_12, %c0_13], %52 {strides = array<i32>} : memref<8x128xf32, #tpu.memory_space<vmem>>, vector<8x128xf32>,
    return
  }
  func.func @transform_0(%arg0: i32) -> i32 {
    %c0_i32 = arith.constant 0 : i32
    %c0_i32_0 = arith.constant 0 : i32
    return %c0_i32 : i32
  }
  func.func @transform_1(%arg0: i32) -> (i32, i32) {
    %c0_i32 = arith.constant 0 : i32
    %c0_i32_0 = arith.constant 0 : i32
    return %arg0, %c0_i32 : i32, i32
  }
  func.func @transform_2(%arg0: i32) -> (i32, i32) {
    %c0_i32 = arith.constant 0 : i32
    %c0_i32_0 = arith.constant 0 : i32
    return %arg0, %c0_i32 : i32, i32
  }
  func.func @transform_3(%arg0: i32) -> (i32, i32) {
    %c0_i32 = arith.constant 0 : i32
    %c0_i32_0 = arith.constant 0 : i32
    return %arg0, %c0_i32 : i32, i32
  }
  func.func @transform_4(%arg0: i32) -> (i32, i32) {
    %c0_i32 = arith.constant 0 : i32
    %c0_i32_0 = arith.constant 0 : i32
    return %arg0, %c0_i32 : i32, i32
  }
}

</mosaic_0001>

<llo_original>
// kernel: tpu_custom_call.1
$region0: #{tpu_custom_call.1}
  #allocation0 [shape = 'u32[]', space=smem, size = 0x4, offset = 0x4, fixed_abs, tag = 'smem constant byte address 0x4 - core index']
  #allocation1 [shape = 'u32[72,128]{1,0:T(1,128)}', space=vmem, size = 0x9000, scoped, tag = 'internal scratch']
  %s0 = inlined_call_operand.hbm [shape: f32[2], index: 0, kind: input, shape index: {}]
  %s1 = inlined_call_operand.hbm [shape: f32[1,128], index: 1, kind: input, shape index: {}]
  %s2 = inlined_call_operand.vmem [shape: f32[1,128], index: 2, kind: input, shape index: {}]
  %s3 = inlined_call_operand.vmem [shape: f32[1,128], index: 3, kind: input, shape index: {}]
  %s4 = inlined_call_operand.hbm [shape: f32[8,128], index: 4, kind: output, shape index: {}]
  %s5 = sld [smem:[#allocation0]]
  $region34: #{tpu_custom_call.1} parent=0
    _
  %s7 = ssub.s32 1, %s5
  %s8 = scalar_select 0, %s7, %s5
  $region1: #{tpu_custom_call.1} parent=0
    #allocation2 [shape = 'u8[512]{0}', space=smem, size = 0x200, scoped, tag = 'input window, operand 0, single buffered']
    #allocation3 [shape = 's32[1]{0}', space=sflag, size = 0x4, scoped, tag = 'scoped memory for tpu_custom_call.1']
    #allocation4 [shape = 's32[1]{0}', space=sflag, size = 0x4, scoped, tag = 'scoped memory for tpu_custom_call.1']
    #allocation5 [shape = 's32[1]{0}', space=sflag, size = 0x4, scoped, tag = 'scoped memory for tpu_custom_call.1']
    #allocation6 [shape = 'u8[512]{0}', space=vmem, size = 0x400, scoped, tag = 'input window, operand 1, single buffered']
    #allocation7 [shape = 'u8[4096]{0}', space=vmem, size = 0x1000, scoped, tag = 'output window, operand 0, single buffered']
    %9 = vsyncpa [#allocation5], 0
    %10 = vsyncpa [#allocation3], 0
    %11 = vsyncpa [#allocation4], 0
    // Predicated region
    $region2: #{tpu_custom_call.1} parent=1 // pred_check
      _
    $region3: #{tpu_custom_call.1} parent=1 // pred_check_branch
      %13 = sbr.rel (0) target = $region5
    $region4: #{tpu_custom_call.1} parent=1 // pred_region
      %15 = vsyncadd [#allocation5], 0
      %s17 = sshll.u32 %s0, 4
      %s18 = int_to_ptr.hbm [resolvable:$true] %s17
      %20 = dma.hbm_to_smem %s18, 16, [#allocation2], [#allocation5]
    $region5: #{tpu_custom_call.1} parent=1 // pred_fallthru
      _
    // Predicated region
    $region6: #{tpu_custom_call.1} parent=1 // pred_check
      _
    $region7: #{tpu_custom_call.1} parent=1 // pred_check_branch
      %22 = sbr.rel (0) target = $region9
    $region8: #{tpu_custom_call.1} parent=1 // pred_region
      %24 = vsyncadd [#allocation3], 0
      %s26 = sshll.u32 %s1, 4
      %s27 = int_to_ptr.hbm [resolvable:$true] %s26
      %s28 = sshll.u32 [#allocation6], 4
      %s29 = int_to_ptr.vmem [resolvable:$true] %s28
      %31 = dma.hbm_to_vmem [thread:$0]  %s27, 16, %s29, [#allocation3]
    $region9: #{tpu_custom_call.1} parent=1 // pred_fallthru
      _
    // Predicated region
    $region10: #{tpu_custom_call.1} parent=1 // pred_check
      _
    $region11: #{tpu_custom_call.1} parent=1 // pred_check_branch
      %33 = sbr.rel (0) target = $region13
    $region12: #{tpu_custom_call.1} parent=1 // pred_region
      _
    $region13: #{tpu_custom_call.1} parent=1 // pred_fallthru
      _
    // Predicated region
    $region14: #{tpu_custom_call.1} parent=1 // pred_check
      _
    $region15: #{tpu_custom_call.1} parent=1 // pred_check_branch
      %35 = sbr.rel (0) target = $region17
    $region16: #{tpu_custom_call.1} parent=1 // pred_region
      _
    $region17: #{tpu_custom_call.1} parent=1 // pred_fallthru
      _
    // Predicated region
    $region18: #{tpu_custom_call.1} parent=1 // pred_check
      _
    $region19: #{tpu_custom_call.1} parent=1 // pred_check_branch
      %37 = sbr.rel (0) target = $region21
    $region20: #{tpu_custom_call.1} parent=1 // pred_region
      %39 = dma.done [#allocation5], 16
    $region21: #{tpu_custom_call.1} parent=1 // pred_fallthru
      _
    // Predicated region
    $region22: #{tpu_custom_call.1} parent=1 // pred_check
      _
    $region23: #{tpu_custom_call.1} parent=1 // pred_check_branch
      %41 = sbr.rel (0) target = $region25
    $region24: #{tpu_custom_call.1} parent=1 // pred_region
      %43 = dma.done [#allocation3], 16
    $region25: #{tpu_custom_call.1} parent=1 // pred_fallthru
      _
    %44 = sfence
    %s45 = sld [smem:[#allocation2]]
    %s46 = sld [smem:[#allocation2 + $0x1]]
    %v47 = vld [vmem:[#allocation6] sm:$0x1]
    %v48 = vld [vmem:[%s2] sm:$0x1]
    %v49 = vld [vmem:[%s3] sm:$0x1]
    %v50 = vlaneseq
    %v51 = vand.u32 %v50, 127
    %vm52 = vcmp.lt.s32.totalorder %v51, 0
    %v53 = vsub.s32 0, %v51
    %v54 = vsel %vm52, %v53, %v51
    %v55 = vshrl.u32 %v54, 3
    %v56 = vand.u32 %v54, 7
    %v57 = vsub.s32 0, %v56
    %v58 = vsel %vm52, %v57, %v56
    %vm59 = vcmp.ne.s32.totalorder %v58, 0
    %vm60 = vcmp.lt.s32.totalorder %v58, 0
    %vm61 = vmand %vm60, %vm59
    %v62 = vadd.s32 %v58, 8
    %v63 = vsel %vm61, %v62, %v58
    %vm64 = vcmp.eq.s32.totalorder %v63, 2
    %v65 = vstv %s45
    %v66 = vmul.f32 %v47, %v65
    %v67 = vstv %s46
    %v68 = vadd.f32 %v66, %v67
    %v69 = vmul.f32 %v68, 1.442695
    %v70 = vpow.pop %v69
    %v71 = vmul.f32 %v48, %v65
    %v72 = vadd.f32 %v71, %v67
    %v73 = vmul.f32 %v72, 1.442695
    %v74 = vpow.pop %v73
    %v75 = vsub.f32 %v70, %v74
    %v76 = vsub.f32 %v47, %v48
    %v77 = vsel %vm64, %v75, %v76
    %v78 = vmul.f32 %v49, 2.3025851
    %v79 = vmul.f32 %v78, %v74
    %v80 = vand.u32 2147483647, %v79
    %v81 = vsel %vm64, %v80, %v49
    %v82 = vmul.f32 %v77, %v77
    %v83 = vrcp.pop %v81
    %v84 = vmul.f32 %v81, %v83
    %v85 = vsub.f32 1.0, %v84
    %v86 = vmul.f32 %v83, %v85
    %v87 = vadd.f32 %v83, %v86
    %vm88 = vweird.f32 %v81
    %vm89 = vweird.f32 %v83
    %vm90 = vmor %vm88, %vm89
    %v91 = vsel %vm90, %v83, %v87
    %v92 = vand.u32 2147483647, %v81
    %vm93 = vcmp.eq.f32.partialorder %v92, 8.507059e+37
    %v94 = vand.u32 %v81, 2147483648
    %v95 = vor.u32 1.1754944e-38, %v94
    %v96 = vsel %vm93, %v95, %v91
    %v97 = vmul.f32 %v82, %v96
    %v98 = vadd.f32 %v97, 0.0
    %v99 = vlaneseq
    %v100 = vshrl.u32 %v99, 7
    %vm101 = vcmp.eq.s32.totalorder %v100, 0
    %v102 = vperm.slane %v98, 0
    %v103 = vsel %vm101, %v102, 0.0
    %104 = vst [vmem:[#allocation7] sm:$0xff] %v103
    // Predicated region
    $region26: #{tpu_custom_call.1} parent=1 // pred_check
      _
    $region27: #{tpu_custom_call.1} parent=1 // pred_check_branch
      %106 = sbr.rel (0) target = $region29
    $region28: #{tpu_custom_call.1} parent=1 // pred_region
      %108 = vsyncadd [#allocation4], 0
      %s110 = sshll.u32 [#allocation7], 4
      %s111 = int_to_ptr.vmem [resolvable:$true] %s110
      %s112 = sshll.u32 %s4, 4
      %s113 = int_to_ptr.hbm [resolvable:$true] %s112
      %115 = dma.vmem_to_hbm [thread:$0]  %s111, 128, %s113, [#allocation4]
    $region29: #{tpu_custom_call.1} parent=1 // pred_fallthru
      _
    // Predicated region
    $region30: #{tpu_custom_call.1} parent=1 // pred_check
      _
    $region31: #{tpu_custom_call.1} parent=1 // pred_check_branch
      %117 = sbr.rel (0) target = $region33
    $region32: #{tpu_custom_call.1} parent=1 // pred_region
      %119 = dma.done [#allocation4], 128
    $region33: #{tpu_custom_call.1} parent=1 // pred_fallthru
      _
    %120 = vsyncpa [#allocation3], 1
    %121 = vsyncpa [#allocation4], 1
    %122 = vsyncpa [#allocation5], 1

</llo_original>
